<compile_context>
chip_gen: v5e
topology: v5e:2x2
jax: 0.10.0
libtpu: 0.0.40
codegen_flags: <defaults>
</compile_context>

<pallas_src>
import jax
import jax.numpy as jnp
from jax import lax
from jax.experimental import pallas as pl
from jax.experimental.pallas import tpu as pltpu

EPS = 1e-5  # torch.nn.LayerNorm default


def _expand_norm_kernel(x_ref, w_ref, p_ref, g_ref, b_ref, o_ref):
    # x_ref: (tm, C)      input pixels for this row tile (tm = kh * W)
    # w_ref: (C, C)       expand-weight slab for this p1 (cols p1*C:(p1+1)*C)
    # p_ref: (C, C)       block-diagonal averaging matrix (1/c per c-group)
    # g_ref, b_ref: (1,C) gamma / beta tiled over the dim_scale p2 groups (f32)
    # o_ref: (kh,1,W,C)   output slab, channel order (p2, ch)
    y = jnp.dot(x_ref[...], w_ref[...], preferred_element_type=jnp.float32)
    p = p_ref[...]
    mean = jnp.dot(y, p, preferred_element_type=jnp.float32)   # per-group mean, lane-broadcast
    d = y - mean
    var = jnp.dot(d * d, p, preferred_element_type=jnp.float32)  # torch-style E[(y-mu)^2]
    rstd = lax.rsqrt(var + EPS)
    out = d * rstd * g_ref[...] + b_ref[...]
    # (tm, C) -> (kh, 1, W, C) only splits leading (sublane-major) dims: free.
    # TODO(synk): for C < 128 a lane-dense (kh, W*C) out block would avoid the
    # masked half-lane stores, but requires a lane-folding vector reshape whose
    # Mosaic lowering cannot be validated here; left as a follow-up sweep.
    o_ref[...] = out.astype(o_ref.dtype).reshape(o_ref.shape)


def _sublane_multiple(itemsize):
    return {4: 8, 2: 16, 1: 32}.get(int(itemsize), 8)


def _pick_rows_per_tile(R, W, C, x_item, out_item, w_item, budget_bytes, sub_req,
                        prefer_min_tiles=2):
    """Pick kh (image rows per tile), dividing R, sublane-legal, within budget."""
    def live_bytes(kh):
        tm = kh * W
        return (2 * tm * C * x_item          # x block (double-buffered)
                + 2 * tm * C * out_item      # out block (double-buffered)
                + 2 * C * C * w_item         # weight slab (double-buffered)
                + C * C * 4 + 2 * C * 4)     # P, gamma, beta

    cands = [kh for kh in range(1, R + 1)
             if R % kh == 0 and ((kh * W) % sub_req == 0 or kh == R)]
    fitting = [kh for kh in cands if live_bytes(kh) <= budget_bytes]
    if fitting:
        # Prefer >= prefer_min_tiles row tiles so the "parallel" axis can be
        # split across v7x's two TensorCores; then take the biggest tile.
        multi = [kh for kh in fitting if R // kh >= prefer_min_tiles]
        kh = max(multi) if multi else max(fitting)
    else:
        # Nothing fits the budget: take the smallest legal tile and let
        # vmem_limit_bytes absorb the overshoot.
        # TODO(synk): pad R (or add a masked tail) for pathological (R, W)
        # where the only legal tile is the whole image.
        kh = min(cands)
    return kh, live_bytes(kh)


def final_patch_expand_2d(x, w, gamma, beta, *, dim_scale=4, out_dtype=None,
                          vmem_budget_bytes=16 << 20):
    """Pallas forward of Final_PatchExpand2D.

    x:     (B, H, W, C) channels-last, C == module `dim` (f32 or bf16)
    w:     (C, dim_scale*C) expand weight stored transposed (y = x @ w)
    gamma: (C // dim_scale,) LayerNorm weight
    beta:  (C // dim_scale,) LayerNorm bias
    out_dtype: output dtype (default: x.dtype).  bf16 halves the dominant
               HBM-write traffic; LayerNorm math is always f32 in-kernel.
    returns (B, H*dim_scale, W*dim_scale, C // dim_scale)
    """
    B, H, W, C = x.shape
    assert C % dim_scale == 0, "dim must be divisible by dim_scale"
    c = C // dim_scale
    assert w.shape == (C, dim_scale * C)
    assert gamma.shape == (c,) and beta.shape == (c,)
    out_dtype = x.dtype if out_dtype is None else out_dtype

    R = B * H                  # image rows
    N = R * W                  # total pixels
    x_item = x.dtype.itemsize
    w_item = w.dtype.itemsize
    out_item = jnp.dtype(out_dtype).itemsize
    sub_req = _sublane_multiple(x_item)

    kh, live = _pick_rows_per_tile(R, W, C, x_item, out_item, w_item,
                                   vmem_budget_bytes, sub_req)
    tm = kh * W                # pixels per grid step
    n_tiles = R // kh

    # 32 MiB is safe on every generation (v7x physical VMEM is 64 MiB); only
    # grow it when the caller asks for bigger tiles.
    vmem_limit = int(max(32 << 20, min(int(1.5 * live) + (2 << 20), 96 << 20)))

    f32 = jnp.float32
    x2 = x.reshape(N, C)
    # per-p1 slabs of the expand weight: slab[p1] = w[:, p1*C:(p1+1)*C]
    # TODO(synk): for very large C keep the full weight resident (constant
    # index map + in-kernel pl.ds slab slice) to avoid re-reading it per tile.
    w_slabs = jnp.transpose(w.reshape(C, dim_scale, C), (1, 0, 2))
    # block-diagonal averaging matrix: P[j, k] = 1/c if j//c == k//c else 0
    grp = jnp.arange(C, dtype=jnp.int32) // c
    p_mat = jnp.where(grp[:, None] == grp[None, :], 1.0 / c, 0.0).astype(f32)
    gamma_t = jnp.tile(gamma.astype(f32), (dim_scale,)).reshape(1, C)
    beta_t = jnp.tile(beta.astype(f32), (dim_scale,)).reshape(1, C)

    cost = pl.CostEstimate(
        flops=6 * N * dim_scale * C * C,                 # expand + 2 stats matmuls
        transcendentals=N * dim_scale * C,               # rsqrt (broadcast form)
        bytes_accessed=(N * C * x_item                               # x read
                        + n_tiles * dim_scale * C * C * w_item       # weight re-reads
                        + N * dim_scale * C * out_item               # output write
                        + C * C * 4),                                # P
    )

    out = pl.pallas_call(
        _expand_norm_kernel,
        out_shape=jax.ShapeDtypeStruct((R, dim_scale, W, C), out_dtype),
        grid_spec=pltpu.PrefetchScalarGridSpec(
            num_scalar_prefetch=0,
            grid=(n_tiles, dim_scale),
            in_specs=[
                # x tile index is constant over the inner p1 axis -> stays resident.
                pl.BlockSpec((tm, C), lambda i, p1: (i, 0)),
                pl.BlockSpec((pl.Squeezed(), C, C), lambda i, p1: (p1, 0, 0)),
                pl.BlockSpec((C, C), lambda i, p1: (0, 0)),
                pl.BlockSpec((1, C), lambda i, p1: (0, 0)),
                pl.BlockSpec((1, C), lambda i, p1: (0, 0)),
            ],
            out_specs=pl.BlockSpec((kh, 1, W, C), lambda i, p1: (i, p1, 0, 0)),
        ),
        compiler_params=pltpu.CompilerParams(
            dimension_semantics=("parallel", "arbitrary"),
            vmem_limit_bytes=vmem_limit,
        ),
        cost_estimate=cost,
    )(x2, w_slabs, p_mat, gamma_t, beta_t)

    # (R, p1, W, p2*c) row-major is exactly 'b (h p1) (w p2) c' -> free reshape.
    return out.reshape(B, H * dim_scale, W * dim_scale, c)


def _reference(x, w, gamma, beta, dim_scale):
    """Pure-JAX reference (high-precision matmul) matching the torch module."""
    B, H, W, C = x.shape
    c = C // dim_scale
    xf = x.astype(jnp.float32)
    wf = w.astype(jnp.float32)
    y = jnp.einsum("bhwc,cd->bhwd", xf, wf, precision=jax.lax.Precision.HIGHEST)
    y = y.reshape(B, H, W, dim_scale, dim_scale, c)
    y = jnp.transpose(y, (0, 1, 3, 2, 4, 5)).reshape(
        B, H * dim_scale, W * dim_scale, c)
    mu = jnp.mean(y, axis=-1, keepdims=True)
    var = jnp.mean((y - mu) ** 2, axis=-1, keepdims=True)
    return (y - mu) * lax.rsqrt(var + EPS) * gamma.astype(jnp.float32) \
        + beta.astype(jnp.float32)


if __name__ == "__main__":
    # Module config: Final_PatchExpand2D(dim=64) -> dim_scale=4, LayerNorm(16).
    dim = 64
    dim_scale = 4
    B, H, W = 2, 16, 16
    C = dim

    key = jax.random.PRNGKey(0)
    kx, kw, kg, kb = jax.random.split(key, 4)

    x = jax.random.normal(kx, (B, H, W, C), dtype=jnp.float32)
    # nn.Linear(dim, dim_scale*dim, bias=False); stored transposed: (C, 4C).
    w = jax.random.normal(kw, (C, dim_scale * C), dtype=jnp.float32) / (C ** 0.5)
    gamma = 1.0 + 0.1 * jax.random.normal(kg, (C // dim_scale,), dtype=jnp.float32)
    beta = 0.1 * jax.random.normal(kb, (C // dim_scale,), dtype=jnp.float32)

    # ---- f32 path (module-default semantics) ----
    out = final_patch_expand_2d(x, w, gamma, beta, dim_scale=dim_scale)
    out = jax.block_until_ready(out)
    assert out.shape == (B, H * dim_scale, W * dim_scale, C // dim_scale)
    ref = _reference(x, w, gamma, beta, dim_scale)
    err = float(jnp.max(jnp.abs(out.astype(jnp.float32) - ref)))
    assert err < 5e-2, f"f32 path max err {err}"

    # ---- bf16 activation path (halves the dominant HBM-write traffic) ----
    xb = x.astype(jnp.bfloat16)
    wb = w.astype(jnp.bfloat16)
    out_b = final_patch_expand_2d(xb, wb, gamma, beta, dim_scale=dim_scale,
                                  out_dtype=jnp.bfloat16)
    out_b = jax.block_until_ready(out_b)
    assert out_b.dtype == jnp.bfloat16
    ref_b = _reference(xb, wb, gamma, beta, dim_scale)
    err_b = float(jnp.max(jnp.abs(out_b.astype(jnp.float32) - ref_b)))
    assert err_b < 1e-1, f"bf16 path max err {err_b}"

    print("KERNEL_OK")
</pallas_src>

<mosaic_0001>
module attributes {stable_mosaic.version = 11 : i64} {
  func.func @_expand_norm_kernel(%arg0: i32, %arg1: i32, %arg2: memref<256x64xf32, #tpu.memory_space<vmem>>, %arg3: memref<1x64x64xf32, #tpu.memory_space<vmem>>, %arg4: memref<64x64xf32, #tpu.memory_space<vmem>>, %arg5: memref<1x64xf32, #tpu.memory_space<vmem>>, %arg6: memref<1x64xf32, #tpu.memory_space<vmem>>, %arg7: memref<16x1x16x64xf32, #tpu.memory_space<vmem>>) attributes {dimension_semantics = [#tpu.dimension_semantics<parallel>, #tpu.dimension_semantics<arbitrary>], iteration_bounds = array<i64: 2, 4>, scalar_prefetch = 0 : i64, scratch_operands = 0 : i64, tpu.core_type = #tpu.core_type<tc>, window_params = [{transform_indices = @transform_0, window_bounds = array<i64: 256, 64>}, {transform_indices = @transform_1, window_bounds = array<i64: 1, 64, 64>}, {pipeline_mode = #tpu.pipeline_mode<synchronous>, transform_indices = @transform_2, window_bounds = array<i64: 64, 64>}, {pipeline_mode = #tpu.pipeline_mode<synchronous>, transform_indices = @transform_3, window_bounds = array<i64: 1, 64>}, {pipeline_mode = #tpu.pipeline_mode<synchronous>, transform_indices = @transform_4, window_bounds = array<i64: 1, 64>}, {transform_indices = @transform_5, window_bounds = array<i64: 16, 1, 16, 64>}]} {
    %c0 = arith.constant 0 : index
    %c0_0 = arith.constant 0 : index
    %0 = vector.load %arg2[%c0, %c0_0] : memref<256x64xf32, #tpu.memory_space<vmem>>, vector<256x64xf32>
    %c0_1 = arith.constant 0 : index
    %c0_2 = arith.constant 0 : index
    %c0_3 = arith.constant 0 : index
    %1 = vector.load %arg3[%c0_1, %c0_2, %c0_3] : memref<1x64x64xf32, #tpu.memory_space<vmem>>, vector<1x64x64xf32>
    %2 = vector.shape_cast %1 : vector<1x64x64xf32> to vector<64x64xf32>
    %cst = arith.constant dense<0.000000e+00> : vector<256x64xf32>
    %3 = tpu.matmul %0, %2, %cst {dimension_numbers = #tpu.dot_dimension_numbers<[1], [0], [0], [1], [0, 0, 1, 1], [], []>} : vector<256x64xf32>, vector<64x64xf32>, vector<256x64xf32> -> vector<256x64xf32>
    %c0_4 = arith.constant 0 : index
    %c0_5 = arith.constant 0 : index
    %4 = vector.load %arg4[%c0_4, %c0_5] : memref<64x64xf32, #tpu.memory_space<vmem>>, vector<64x64xf32>
    %cst_6 = arith.constant dense<0.000000e+00> : vector<256x64xf32>
    %5 = tpu.matmul %3, %4, %cst_6 {dimension_numbers = #tpu.dot_dimension_numbers<[1], [0], [0], [1], [0, 0, 1, 1], [], []>} : vector<256x64xf32>, vector<64x64xf32>, vector<256x64xf32> -> vector<256x64xf32>
    %6 = arith.subf %3, %5 : vector<256x64xf32>
    %7 = arith.mulf %6, %6 : vector<256x64xf32>
    %cst_7 = arith.constant dense<0.000000e+00> : vector<256x64xf32>
    %8 = tpu.matmul %7, %4, %cst_7 {dimension_numbers = #tpu.dot_dimension_numbers<[1], [0], [0], [1], [0, 0, 1, 1], [], []>} : vector<256x64xf32>, vector<64x64xf32>, vector<256x64xf32> -> vector<256x64xf32>
    %cst_8 = arith.constant 9.99999974E-6 : f32
    %9 = vector.broadcast %cst_8 : f32 to vector<256x64xf32>
    %10 = arith.addf %8, %9 : vector<256x64xf32>
    %11 = math.rsqrt %10 : vector<256x64xf32>
    %12 = arith.mulf %6, %11 : vector<256x64xf32>
    %c0_9 = arith.constant 0 : index
    %c0_10 = arith.constant 0 : index
    %13 = vector.load %arg5[%c0_9, %c0_10] : memref<1x64xf32, #tpu.memory_space<vmem>>, vector<1x64xf32>
    %14 = vector.broadcast %13 : vector<1x64xf32> to vector<256x64xf32>
    %15 = arith.mulf %12, %14 : vector<256x64xf32>
    %c0_11 = arith.constant 0 : index
    %c0_12 = arith.constant 0 : index
    %16 = vector.load %arg6[%c0_11, %c0_12] : memref<1x64xf32, #tpu.memory_space<vmem>>, vector<1x64xf32>
    %17 = vector.broadcast %16 : vector<1x64xf32> to vector<256x64xf32>
    %18 = arith.addf %15, %17 : vector<256x64xf32>
    %19 = vector.shape_cast %18 : vector<256x64xf32> to vector<16x1x16x64xf32>
    %c0_13 = arith.constant 0 : index
    %c0_14 = arith.constant 0 : index
    %c0_15 = arith.constant 0 : index
    %c0_16 = arith.constant 0 : index
    %20 = vector.load %arg7[%c0_13, %c0_14, %c0_15, %c0_16] : memref<16x1x16x64xf32, #tpu.memory_space<vmem>>, vector<16x1x16x64xf32>
    tpu.vector_store %arg7[%c0_13, %c0_14, %c0_15, %c0_16], %19 {strides = array<i32>} : memref<16x1x16x64xf32, #tpu.memory_space<vmem>>, vector<16x1x16x64xf32>,
    return
  }
  func.func @transform_0(%arg0: i32, %arg1: i32) -> (i32, i32) {
    %c0_i32 = arith.constant 0 : i32
    %c0_i32_0 = arith.constant 0 : i32
    return %arg0, %c0_i32 : i32, i32
  }
  func.func @transform_1(%arg0: i32, %arg1: i32) -> (i32, i32, i32) {
    %c0_i32 = arith.constant 0 : i32
    %c0_i32_0 = arith.constant 0 : i32
    %c0_i32_1 = arith.constant 0 : i32
    return %arg1, %c0_i32, %c0_i32_0 : i32, i32, i32
  }
  func.func @transform_2(%arg0: i32, %arg1: i32) -> (i32, i32) {
    %c0_i32 = arith.constant 0 : i32
    %c0_i32_0 = arith.constant 0 : i32
    %c0_i32_1 = arith.constant 0 : i32
    return %c0_i32, %c0_i32_0 : i32, i32
  }
  func.func @transform_3(%arg0: i32, %arg1: i32) -> (i32, i32) {
    %c0_i32 = arith.constant 0 : i32
    %c0_i32_0 = arith.constant 0 : i32
    %c0_i32_1 = arith.constant 0 : i32
    return %c0_i32, %c0_i32_0 : i32, i32
  }
  func.func @transform_4(%arg0: i32, %arg1: i32) -> (i32, i32) {
    %c0_i32 = arith.constant 0 : i32
    %c0_i32_0 = arith.constant 0 : i32
    %c0_i32_1 = arith.constant 0 : i32
    return %c0_i32, %c0_i32_0 : i32, i32
  }
  func.func @transform_5(%arg0: i32, %arg1: i32) -> (i32, i32, i32, i32) {
    %c0_i32 = arith.constant 0 : i32
    %c0_i32_0 = arith.constant 0 : i32
    %c0_i32_1 = arith.constant 0 : i32
    return %arg0, %arg1, %c0_i32, %c0_i32_0 : i32, i32, i32, i32
  }
}

</mosaic_0001>

<llo_original>
// kernel: tpu_custom_call.1
$region0: #{tpu_custom_call.1}
  #allocation0 [shape = 'u32[]', space=smem, size = 0x4, offset = 0x4, fixed_abs, tag = 'smem constant byte address 0x4 - core index']
  #allocation1 [shape = 'u32[72,128]{1,0:T(1,128)}', space=vmem, size = 0x9000, scoped, tag = 'internal scratch']
  #allocation4 [shape = 's32[]', space=sflag, size = 0x4, offset = 0, fixed_abs, tag = 'sflag constant byte address 0x0 - dummy sync flag']
  %s0 = inlined_call_operand.vmem [shape: f32[512,64], index: 0, kind: input, shape index: {}]
  %s1 = inlined_call_operand.vmem [shape: f32[4,64,64], index: 1, kind: input, shape index: {}]
  %s2 = inlined_call_operand.vmem [shape: f32[64,64], index: 2, kind: input, shape index: {}]
  %s3 = inlined_call_operand.vmem [shape: f32[1,64], index: 3, kind: input, shape index: {}]
  %s4 = inlined_call_operand.vmem [shape: f32[1,64], index: 4, kind: input, shape index: {}]
  %s5 = inlined_call_operand.hbm [shape: f32[32,4,16,64], index: 5, kind: output, shape index: {}]
  %s6 = sld [smem:[#allocation0]]
  $region53: #{tpu_custom_call.1} parent=0
    _
  %s8 = ssub.s32 1, %s6
  %s9 = scalar_select 0, %s8, %s6
  $region1: #{tpu_custom_call.1} parent=0
    #allocation2 [shape = 'u8[262144]{0}', space=vmem, size = 0x40000, scoped, tag = 'output window, operand 0']
    #allocation3 [shape = 's32[2]{0}', space=sflag, size = 0x8, scoped, tag = 'scoped memory for tpu_custom_call.1']
    %10 = vsyncpa [#allocation3], 0
    %s11 = scalar_lea.sflag [#allocation3], 1
    %12 = vsyncpa %s11, 0
    loop: start=0, step=1, limit=10
    $region2: #{tpu_custom_call.1} parent=1 // loop_pre_header
      _
    $region3: #{tpu_custom_call.1} parent=1 // loop_header
      %s14 = sphi 0, %s18
      %p15 = scmp.ge.s32.totalorder %s14, 10
      %s21 = sphi 0, %s33
      %s22 = sphi 0, %s29
      %s23 = sphi 0, %s21
      %s24 = sphi 0, %s22
      %s25 = sphi 0, %s23
      %s26 = sphi 0, %s24
      %s36 = sphi 0, %s38
      %s39 = sphi 0, %s36
      %s40 = sphi 0, %s39
      %s56 = sphi 0, %s40
      %s62 = sphi 0, %s64
      %s65 = sphi 0, %s62
      %s66 = sphi 0, %s65
      %s82 = sphi 0, %s66
      %s86 = sphi 0, %s86
      %s88 = sphi 0, %s86
      %s89 = sphi 0, %s88
      %s103 = sphi 0, %s89
      %s107 = sphi 0, %s107
      %s109 = sphi 0, %s107
      %s110 = sphi 0, %s109
      %s124 = sphi 0, %s110
      %s128 = sphi 0, %s128
      %s130 = sphi 0, %s128
      %s131 = sphi 0, %s130
      %s145 = sphi 0, %s131
      %s153 = sphi 0, %s155
      %s156 = sphi 0, %s153
      %s157 = sphi 0, %s156
      %s173 = sphi 0, %s157
    $region4: #{tpu_custom_call.1} parent=1 // loop_header_branch
      %17 = sbr.rel (%p15) target = $region8
    $region5: #{tpu_custom_call.1} parent=1 // loop_body
      %s19 = ssub.s32 %s14, 1
      %s20 = ssub.s32 %s14, 2
      %s27 = sadd.s32 1, %s22
      %p28 = scmp.ge.s32.totalorder %s27, 4
      %s29 = scalar_select %p28, 0, %s27
      %s30 = sadd.s32 1, %s21
      %s31 = scalar_select %p28, %s30, %s21
      %p32 = scmp.ge.s32.totalorder %s31, 2
      %s33 = scalar_select %p32, 0, %s31
      %s34 = ssub.s32 %s21, %s33
      %p35 = scmp.eq.s32.totalorder %s34, 0
      %s37 = sadd.s32 %s36, 1
      %s38 = scalar_select %p35, %s36, %s37
      %p41 = pneg %p35
      %p42 = scmp.eq.s32.totalorder %s14, 7
      %p43 = por %p41, %p42
      %p44 = scmp.ne.s32.totalorder %s36, %s39
      %p45 = scmp.eq.s32.totalorder %s14, 0
      %p46 = por %p44, %p45
      %p47 = scmp.ne.s32.totalorder %s36, %s39
      %p48 = scmp.eq.s32.totalorder %s19, 7
      %p49 = por %p47, %p48
      %p50 = scmp.ne.s32.totalorder %s39, %s40
      %p51 = scmp.eq.s32.totalorder %s19, 0
      %p52 = por %p50, %p51
      %p53 = scmp.ne.s32.totalorder %s39, %s40
      %p54 = scmp.eq.s32.totalorder %s20, 7
      %p55 = por %p53, %p54
      %p57 = scmp.ne.s32.totalorder %s40, %s56
      %p58 = scmp.eq.s32.totalorder %s20, 0
      %p59 = por %p57, %p58
      %s60 = ssub.s32 %s22, %s29
      %p61 = scmp.eq.s32.totalorder %s60, 0
      %s63 = sadd.s32 %s62, 1
      %s64 = scalar_select %p61, %s62, %s63
      %p67 = pneg %p61
      %p68 = scmp.eq.s32.totalorder %s14, 7
      %p69 = por %p67, %p68
      %p70 = scmp.ne.s32.totalorder %s62, %s65
      %p71 = scmp.eq.s32.totalorder %s14, 0
      %p72 = por %p70, %p71
      %p73 = scmp.ne.s32.totalorder %s62, %s65
      %p74 = scmp.eq.s32.totalorder %s19, 7
      %p75 = por %p73, %p74
      %p76 = scmp.ne.s32.totalorder %s65, %s66
      %p77 = scmp.eq.s32.totalorder %s19, 0
      %p78 = por %p76, %p77
      %p79 = scmp.ne.s32.totalorder %s65, %s66
      %p80 = scmp.eq.s32.totalorder %s20, 7
      %p81 = por %p79, %p80
      %p83 = scmp.ne.s32.totalorder %s66, %s82
      %p84 = scmp.eq.s32.totalorder %s20, 0
      %p85 = por %p83, %p84
      %s87 = sadd.s32 %s86, 1
      %p90 = scmp.eq.s32.totalorder %s14, 7
      %p91 = scmp.ne.s32.totalorder %s86, %s88
      %p92 = scmp.eq.s32.totalorder %s14, 0
      %p93 = por %p91, %p92
      %p94 = scmp.ne.s32.totalorder %s86, %s88
      %p95 = scmp.eq.s32.totalorder %s19, 7
      %p96 = por %p94, %p95
      %p97 = scmp.ne.s32.totalorder %s88, %s89
      %p98 = scmp.eq.s32.totalorder %s19, 0
      %p99 = por %p97, %p98
      %p100 = scmp.ne.s32.totalorder %s88, %s89
      %p101 = scmp.eq.s32.totalorder %s20, 7
      %p102 = por %p100, %p101
      %p104 = scmp.ne.s32.totalorder %s89, %s103
      %p105 = scmp.eq.s32.totalorder %s20, 0
      %p106 = por %p104, %p105
      %s108 = sadd.s32 %s107, 1
      %p111 = scmp.eq.s32.totalorder %s14, 7
      %p112 = scmp.ne.s32.totalorder %s107, %s109
      %p113 = scmp.eq.s32.totalorder %s14, 0
      %p114 = por %p112, %p113
      %p115 = scmp.ne.s32.totalorder %s107, %s109
      %p116 = scmp.eq.s32.totalorder %s19, 7
      %p117 = por %p115, %p116
      %p118 = scmp.ne.s32.totalorder %s109, %s110
      %p119 = scmp.eq.s32.totalorder %s19, 0
      %p120 = por %p118, %p119
      %p121 = scmp.ne.s32.totalorder %s109, %s110
      %p122 = scmp.eq.s32.totalorder %s20, 7
      %p123 = por %p121, %p122
      %p125 = scmp.ne.s32.totalorder %s110, %s124
      %p126 = scmp.eq.s32.totalorder %s20, 0
      %p127 = por %p125, %p126
      %s129 = sadd.s32 %s128, 1
      %p132 = scmp.eq.s32.totalorder %s14, 7
      %p133 = scmp.ne.s32.totalorder %s128, %s130
      %p134 = scmp.eq.s32.totalorder %s14, 0
      %p135 = por %p133, %p134
      %p136 = scmp.ne.s32.totalorder %s128, %s130
      %p137 = scmp.eq.s32.totalorder %s19, 7
      %p138 = por %p136, %p137
      %p139 = scmp.ne.s32.totalorder %s130, %s131
      %p140 = scmp.eq.s32.totalorder %s19, 0
      %p141 = por %p139, %p140
      %p142 = scmp.ne.s32.totalorder %s130, %s131
      %p143 = scmp.eq.s32.totalorder %s20, 7
      %p144 = por %p142, %p143
      %p146 = scmp.ne.s32.totalorder %s131, %s145
      %p147 = scmp.eq.s32.totalorder %s20, 0
      %p148 = por %p146, %p147
      %s149 = ssub.s32 %s21, %s33
      %s150 = ssub.s32 %s22, %s29
      %s151 = sor.u32 %s149, %s150
      %p152 = scmp.eq.s32.totalorder %s151, 0
      %s154 = sadd.s32 %s153, 1
      %s155 = scalar_select %p152, %s153, %s154
      %p158 = pneg %p152
      %p159 = scmp.eq.s32.totalorder %s14, 7
      %p160 = por %p158, %p159
      %p161 = scmp.ne.s32.totalorder %s153, %s156
      %p162 = scmp.eq.s32.totalorder %s14, 0
      %p163 = por %p161, %p162
      %p164 = scmp.ne.s32.totalorder %s153, %s156
      %p165 = scmp.eq.s32.totalorder %s19, 7
      %p166 = por %p164, %p165
      %p167 = scmp.ne.s32.totalorder %s156, %s157
      %p168 = scmp.eq.s32.totalorder %s19, 0
      %p169 = por %p167, %p168
      %p170 = scmp.ne.s32.totalorder %s156, %s157
      %p171 = scmp.eq.s32.totalorder %s20, 7
      %p172 = por %p170, %p171
      %p174 = scmp.ne.s32.totalorder %s157, %s173
      %p175 = scmp.eq.s32.totalorder %s20, 0
      %p176 = por %p174, %p175
      %p177 = scmp.le.s32.totalorder 1, %s14
      %p178 = scmp.lt.s32.totalorder %s14, 9
      %p179 = pnand %p177, %p178
      %p180 = pneg %p179
      // Predicated region
      $region9: #{tpu_custom_call.1} parent=5 // pred_check
        _
      $region10: #{tpu_custom_call.1} parent=5 // pred_check_branch
        %182 = sbr.rel (%p179) target = $region12
      $region11: #{tpu_custom_call.1} parent=5 // pred_region
        %s183 = ssub.s32 %s14, 1
        // Predicated region
        $region13: #{tpu_custom_call.1} parent=11 // pred_check
          %p184 = pneg %p99
        $region14: #{tpu_custom_call.1} parent=11 // pred_check_branch
          %186 = sbr.rel (%p184) target = $region16
        $region15: #{tpu_custom_call.1} parent=11 // pred_region
          _
        $region16: #{tpu_custom_call.1} parent=11 // pred_fallthru
          _
        // Predicated region
        $region17: #{tpu_custom_call.1} parent=11 // pred_check
          %p187 = pneg %p120
        $region18: #{tpu_custom_call.1} parent=11 // pred_check_branch
          %189 = sbr.rel (%p187) target = $region20
        $region19: #{tpu_custom_call.1} parent=11 // pred_region
          _
        $region20: #{tpu_custom_call.1} parent=11 // pred_fallthru
          _
        // Predicated region
        $region21: #{tpu_custom_call.1} parent=11 // pred_check
          %p190 = pneg %p141
        $region22: #{tpu_custom_call.1} parent=11 // pred_check_branch
          %192 = sbr.rel (%p190) target = $region24
        $region23: #{tpu_custom_call.1} parent=11 // pred_region
          _
        $region24: #{tpu_custom_call.1} parent=11 // pred_fallthru
          _
      $region12: #{tpu_custom_call.1} parent=5 // pred_fallthru
        _
      %p193 = scmp.lt.s32.totalorder %s14, 8
      // Predicated region
      $region25: #{tpu_custom_call.1} parent=5 // pred_check
        %p194 = pneg %p193
      $region26: #{tpu_custom_call.1} parent=5 // pred_check_branch
        %196 = sbr.rel (%p194) target = $region28
      $region27: #{tpu_custom_call.1} parent=5 // pred_region
        // Predicated region
        $region29: #{tpu_custom_call.1} parent=27 // pred_check
          %p197 = pneg %p46
        $region30: #{tpu_custom_call.1} parent=27 // pred_check_branch
          %199 = sbr.rel (%p197) target = $region32
        $region31: #{tpu_custom_call.1} parent=27 // pred_region
          %s200 = smul.u32 32, %s21
          %p201 = scmp.lt.s32.totalorder %s200, 63
          %s202 = scalar_select %p201, %s200, 63
          %s203 = smul.addr %s202, 8
          %s204 = scalar_lea.vmem %s0, %s203
          %s205 = smul.u32 32, %s21
        $region32: #{tpu_custom_call.1} parent=27 // pred_fallthru
          _
        // Predicated region
        $region33: #{tpu_custom_call.1} parent=27 // pred_check
          %p206 = pneg %p72
        $region34: #{tpu_custom_call.1} parent=27 // pred_check_branch
          %208 = sbr.rel (%p206) target = $region36
        $region35: #{tpu_custom_call.1} parent=27 // pred_region
          %p209 = scmp.lt.s32.totalorder %s22, 3
          %s210 = scalar_select %p209, %s22, 3
          %s211 = smul.addr %s210, 8
          %s212 = smul.addr %s211, 8
          %s213 = scalar_lea.vmem %s1, %s212
        $region36: #{tpu_custom_call.1} parent=27 // pred_fallthru
          _
      $region28: #{tpu_custom_call.1} parent=5 // pred_fallthru
        _
      %p214 = scmp.le.s32.totalorder 1, %s14
      %p215 = scmp.lt.s32.totalorder %s14, 9
      %p216 = pnand %p214, %p215
      %p217 = pneg %p216
      // Predicated region
      $region37: #{tpu_custom_call.1} parent=5 // pred_check
        _
      $region38: #{tpu_custom_call.1} parent=5 // pred_check_branch
        %219 = sbr.rel (%p216) target = $region40
      $region39: #{tpu_custom_call.1} parent=5 // pred_region
        %s220 = ssub.s32 %s14, 1
        %s221 = smul.u32 32, %s23
        %p222 = scmp.lt.s32.totalorder %s221, 63
        %s223 = scalar_select %p222, %s221, 63
        %s224 = smul.addr %s223, 8
        %s225 = scalar_lea.vmem %s0, %s224
        %p226 = pneg %p52
        %p227 = pneg %p49
        %p228 = scmp.lt.s32.totalorder %s24, 3
        %s229 = scalar_select %p228, %s24, 3
        %s230 = smul.addr %s229, 8
        %s231 = smul.addr %s230, 8
        %s232 = scalar_lea.vmem %s1, %s231
        %p233 = pneg %p78
        %p234 = pneg %p75
        %p235 = pneg %p99
        %p236 = pneg %p96
        %p237 = pneg %p120
        %p238 = pneg %p117
        %p239 = pneg %p141
        %p240 = pneg %p138
        %p241 = pneg %p169
        %p242 = pneg %p166
        %s243 = sand.u32 %s156, 1
        %s244 = scalar_lea.sflag [#allocation3], %s243
        %s245 = sand.u32 %s156, 1
        %s246 = smul.addr %s245, 256
        %s247 = scalar_lea.vmem [#allocation2], %s246
        %s248 = smul.u32 32, %s23
        %p249 = scmp.lt.s32.totalorder %s248, 63
        %s250 = scalar_select %p249, %s248, 63
        %s251 = smul.addr %s250, 8
        %s252 = scalar_lea.vmem %s0, %s251
        %s253 = smul.u32 32, %s23
        %p254 = scmp.lt.s32.totalorder %s24, 3
        %s255 = scalar_select %p254, %s24, 3
        %s256 = smul.addr %s255, 8
        %s257 = smul.addr %s256, 8
        %s258 = scalar_lea.vmem %s1, %s257
        %s259 = smul.u32 16, %s23
        %v260 = vld [vmem:[%s252] sm:$0xff]
        %v261 = vld [vmem:[%s252 + $0x8] sm:$0xff]
        %v262 = vld [vmem:[%s252 + $0x10] sm:$0xff]
        %v263 = vld [vmem:[%s252 + $0x18] sm:$0xff]
        %v264 = vld [vmem:[%s252 + $0x20] sm:$0xff]
        %v265 = vld [vmem:[%s252 + $0x28] sm:$0xff]
        %v266 = vld [vmem:[%s252 + $0x30] sm:$0xff]
        %v267 = vld [vmem:[%s252 + $0x38] sm:$0xff]
        %v268 = vld [vmem:[%s252 + $0x40] sm:$0xff]
        %v269 = vld [vmem:[%s252 + $0x48] sm:$0xff]
        %v270 = vld [vmem:[%s252 + $0x50] sm:$0xff]
        %v271 = vld [vmem:[%s252 + $0x58] sm:$0xff]
        %v272 = vld [vmem:[%s252 + $0x60] sm:$0xff]
        %v273 = vld [vmem:[%s252 + $0x68] sm:$0xff]
        %v274 = vld [vmem:[%s252 + $0x70] sm:$0xff]
        %v275 = vld [vmem:[%s252 + $0x78] sm:$0xff]
        %v276 = vld [vmem:[%s252 + $0x80] sm:$0xff]
        %v277 = vld [vmem:[%s252 + $0x88] sm:$0xff]
        %v278 = vld [vmem:[%s252 + $0x90] sm:$0xff]
        %v279 = vld [vmem:[%s252 + $0x98] sm:$0xff]
        %v280 = vld [vmem:[%s252 + $0xa0] sm:$0xff]
        %v281 = vld [vmem:[%s252 + $0xa8] sm:$0xff]
        %v282 = vld [vmem:[%s252 + $0xb0] sm:$0xff]
        %v283 = vld [vmem:[%s252 + $0xb8] sm:$0xff]
        %v284 = vld [vmem:[%s252 + $0xc0] sm:$0xff]
        %v285 = vld [vmem:[%s252 + $0xc8] sm:$0xff]
        %v286 = vld [vmem:[%s252 + $0xd0] sm:$0xff]
        %v287 = vld [vmem:[%s252 + $0xd8] sm:$0xff]
        %v288 = vld [vmem:[%s252 + $0xe0] sm:$0xff]
        %v289 = vld [vmem:[%s252 + $0xe8] sm:$0xff]
        %v290 = vld [vmem:[%s252 + $0xf0] sm:$0xff]
        %v291 = vld [vmem:[%s252 + $0xf8] sm:$0xff]
        %v292 = vld [vmem:[%s258] sm:$0xff]
        %v293 = vld [vmem:[%s258 + $0x8] sm:$0xff]
        %v294 = vld [vmem:[%s258 + $0x10] sm:$0xff]
        %v295 = vld [vmem:[%s258 + $0x18] sm:$0xff]
        %v296 = vld [vmem:[%s258 + $0x20] sm:$0xff]
        %v297 = vld [vmem:[%s258 + $0x28] sm:$0xff]
        %v298 = vld [vmem:[%s258 + $0x30] sm:$0xff]
        %v299 = vld [vmem:[%s258 + $0x38] sm:$0xff]
        %vm300 = vcmask 523264
        %v302 = vsel %vm300, %v260, 0
        %v305 = vsel %vm300, %v261, 0
        %v308 = vsel %vm300, %v262, 0
        %v311 = vsel %vm300, %v263, 0
        %v314 = vsel %vm300, %v264, 0
        %v317 = vsel %vm300, %v265, 0
        %v320 = vsel %vm300, %v266, 0
        %v323 = vsel %vm300, %v267, 0
        %v326 = vsel %vm300, %v268, 0
        %v329 = vsel %vm300, %v269, 0
        %v332 = vsel %vm300, %v270, 0
        %v335 = vsel %vm300, %v271, 0
        %v338 = vsel %vm300, %v272, 0
        %v341 = vsel %vm300, %v273, 0
        %v344 = vsel %vm300, %v274, 0
        %v347 = vsel %vm300, %v275, 0
        %v350 = vsel %vm300, %v276, 0
        %v353 = vsel %vm300, %v277, 0
        %v356 = vsel %vm300, %v278, 0
        %v359 = vsel %vm300, %v279, 0
        %v362 = vsel %vm300, %v280, 0
        %v365 = vsel %vm300, %v281, 0
        %v368 = vsel %vm300, %v282, 0
        %v371 = vsel %vm300, %v283, 0
        %v374 = vsel %vm300, %v284, 0
        %v377 = vsel %vm300, %v285, 0
        %v380 = vsel %vm300, %v286, 0
        %v383 = vsel %vm300, %v287, 0
        %v386 = vsel %vm300, %v288, 0
        %v389 = vsel %vm300, %v289, 0
        %v392 = vsel %vm300, %v290, 0
        %v395 = vsel %vm300, %v291, 0
        %397 = vmatpush.msra.mxu0 0.0
        %398 = vmatpush.msra.mxu0 0.0
        %399 = vmatpush.msra.mxu0 0.0
        %400 = vmatpush.msra.mxu0 0.0
        %401 = vmatpush.msra.mxu0 0.0
        %402 = vmatpush.msra.mxu0 0.0
        %403 = vmatpush.msra.mxu0 0.0
        %404 = vmatpush.msra.mxu0 0.0
        %405 = vmatpush.msra.mxu0 %v299
        %406 = vmatpush.msra.mxu0 %v298
        %407 = vmatpush.msra.mxu0 %v297
        %408 = vmatpush.msra.mxu0 %v296
        %409 = vmatpush.msra.mxu0 %v295
        %410 = vmatpush.msra.mxu0 %v294
        %411 = vmatpush.msra.mxu0 %v293
        %412 = vmatpush.msra.mxu0 %v292
        %413 = vmatmul.f32.gmra.mxu0 %v302
        %v414 = vpop.f32.mrf.mxu0
        %v415 = vadd.f32 0.0, %v414
        %416 = vmatmul.f32.gmra.mxu0 %v305
        %v417 = vpop.f32.mrf.mxu0
        %v418 = vadd.f32 0.0, %v417
        %419 = vmatmul.f32.gmra.mxu0 %v308
        %v420 = vpop.f32.mrf.mxu0
        %v421 = vadd.f32 0.0, %v420
        %422 = vmatmul.f32.gmra.mxu0 %v311
        %v423 = vpop.f32.mrf.mxu0
        %v424 = vadd.f32 0.0, %v423
        %425 = vmatmul.f32.gmra.mxu0 %v314
        %v426 = vpop.f32.mrf.mxu0
        %v427 = vadd.f32 0.0, %v426
        %428 = vmatmul.f32.gmra.mxu0 %v317
        %v429 = vpop.f32.mrf.mxu0
        %v430 = vadd.f32 0.0, %v429
        %431 = vmatmul.f32.gmra.mxu0 %v320
        %v432 = vpop.f32.mrf.mxu0
        %v433 = vadd.f32 0.0, %v432
        %434 = vmatmul.f32.gmra.mxu0 %v323
        %v435 = vpop.f32.mrf.mxu0
        %v436 = vadd.f32 0.0, %v435
        %437 = vmatmul.f32.gmra.mxu0 %v326
        %v438 = vpop.f32.mrf.mxu0
        %v439 = vadd.f32 0.0, %v438
        %440 = vmatmul.f32.gmra.mxu0 %v329
        %v441 = vpop.f32.mrf.mxu0
        %v442 = vadd.f32 0.0, %v441
        %443 = vmatmul.f32.gmra.mxu0 %v332
        %v444 = vpop.f32.mrf.mxu0
        %v445 = vadd.f32 0.0, %v444
        %446 = vmatmul.f32.gmra.mxu0 %v335
        %v447 = vpop.f32.mrf.mxu0
        %v448 = vadd.f32 0.0, %v447
        %449 = vmatmul.f32.gmra.mxu0 %v338
        %v450 = vpop.f32.mrf.mxu0
        %v451 = vadd.f32 0.0, %v450
        %452 = vmatmul.f32.gmra.mxu0 %v341
        %v453 = vpop.f32.mrf.mxu0
        %v454 = vadd.f32 0.0, %v453
        %455 = vmatmul.f32.gmra.mxu0 %v344
        %v456 = vpop.f32.mrf.mxu0
        %v457 = vadd.f32 0.0, %v456
        %458 = vmatmul.f32.gmra.mxu0 %v347
        %v459 = vpop.f32.mrf.mxu0
        %v460 = vadd.f32 0.0, %v459
        %461 = vmatmul.f32.gmra.mxu0 %v350
        %v462 = vpop.f32.mrf.mxu0
        %v463 = vadd.f32 0.0, %v462
        %464 = vmatmul.f32.gmra.mxu0 %v353
        %v465 = vpop.f32.mrf.mxu0
        %v466 = vadd.f32 0.0, %v465
        %467 = vmatmul.f32.gmra.mxu0 %v356
        %v468 = vpop.f32.mrf.mxu0
        %v469 = vadd.f32 0.0, %v468
        %470 = vmatmul.f32.gmra.mxu0 %v359
        %v471 = vpop.f32.mrf.mxu0
        %v472 = vadd.f32 0.0, %v471
        %473 = vmatmul.f32.gmra.mxu0 %v362
        %v474 = vpop.f32.mrf.mxu0
        %v475 = vadd.f32 0.0, %v474
        %476 = vmatmul.f32.gmra.mxu0 %v365
        %v477 = vpop.f32.mrf.mxu0
        %v478 = vadd.f32 0.0, %v477
        %479 = vmatmul.f32.gmra.mxu0 %v368
        %v480 = vpop.f32.mrf.mxu0
        %v481 = vadd.f32 0.0, %v480
        %482 = vmatmul.f32.gmra.mxu0 %v371
        %v483 = vpop.f32.mrf.mxu0
        %v484 = vadd.f32 0.0, %v483
        %485 = vmatmul.f32.gmra.mxu0 %v374
        %v486 = vpop.f32.mrf.mxu0
        %v487 = vadd.f32 0.0, %v486
        %488 = vmatmul.f32.gmra.mxu0 %v377
        %v489 = vpop.f32.mrf.mxu0
        %v490 = vadd.f32 0.0, %v489
        %491 = vmatmul.f32.gmra.mxu0 %v380
        %v492 = vpop.f32.mrf.mxu0
        %v493 = vadd.f32 0.0, %v492
        %494 = vmatmul.f32.gmra.mxu0 %v383
        %v495 = vpop.f32.mrf.mxu0
        %v496 = vadd.f32 0.0, %v495
        %497 = vmatmul.f32.gmra.mxu0 %v386
        %v498 = vpop.f32.mrf.mxu0
        %v499 = vadd.f32 0.0, %v498
        %500 = vmatmul.f32.gmra.mxu0 %v389
        %v501 = vpop.f32.mrf.mxu0
        %v502 = vadd.f32 0.0, %v501
        %503 = vmatmul.f32.gmra.mxu0 %v392
        %v504 = vpop.f32.mrf.mxu0
        %v505 = vadd.f32 0.0, %v504
        %506 = vmatmul.f32.gmra.mxu0 %v395
        %v507 = vpop.f32.mrf.mxu0
        %v508 = vadd.f32 0.0, %v507
        %509 = vdwg.mxu0
        %v510 = vld [vmem:[%s2] sm:$0xff]
        %v511 = vld [vmem:[%s2 + $0x8] sm:$0xff]
        %v512 = vld [vmem:[%s2 + $0x10] sm:$0xff]
        %v513 = vld [vmem:[%s2 + $0x18] sm:$0xff]
        %v514 = vld [vmem:[%s2 + $0x20] sm:$0xff]
        %v515 = vld [vmem:[%s2 + $0x28] sm:$0xff]
        %v516 = vld [vmem:[%s2 + $0x30] sm:$0xff]
        %v517 = vld [vmem:[%s2 + $0x38] sm:$0xff]
        %v519 = vsel %vm300, %v415, 0
        %v522 = vsel %vm300, %v418, 0
        %v525 = vsel %vm300, %v421, 0
        %v528 = vsel %vm300, %v424, 0
        %v531 = vsel %vm300, %v427, 0
        %v534 = vsel %vm300, %v430, 0
        %v537 = vsel %vm300, %v433, 0
        %v540 = vsel %vm300, %v436, 0
        %v543 = vsel %vm300, %v439, 0
        %v546 = vsel %vm300, %v442, 0
        %v549 = vsel %vm300, %v445, 0
        %v552 = vsel %vm300, %v448, 0
        %v555 = vsel %vm300, %v451, 0
        %v558 = vsel %vm300, %v454, 0
        %v561 = vsel %vm300, %v457, 0
        %v564 = vsel %vm300, %v460, 0
        %v567 = vsel %vm300, %v463, 0
        %v570 = vsel %vm300, %v466, 0
        %v573 = vsel %vm300, %v469, 0
        %v576 = vsel %vm300, %v472, 0
        %v579 = vsel %vm300, %v475, 0
        %v582 = vsel %vm300, %v478, 0
        %v585 = vsel %vm300, %v481, 0
        %v588 = vsel %vm300, %v484, 0
        %v591 = vsel %vm300, %v487, 0
        %v594 = vsel %vm300, %v490, 0
        %v597 = vsel %vm300, %v493, 0
        %v600 = vsel %vm300, %v496, 0
        %v603 = vsel %vm300, %v499, 0
        %v606 = vsel %vm300, %v502, 0
        %v609 = vsel %vm300, %v505, 0
        %v612 = vsel %vm300, %v508, 0
        %614 = vmatpush.msra.mxu0 0.0
        %615 = vmatpush.msra.mxu0 0.0
        %616 = vmatpush.msra.mxu0 0.0
        %617 = vmatpush.msra.mxu0 0.0
        %618 = vmatpush.msra.mxu0 0.0
        %619 = vmatpush.msra.mxu0 0.0
        %620 = vmatpush.msra.mxu0 0.0
        %621 = vmatpush.msra.mxu0 0.0
        %622 = vmatpush.msra.mxu0 %v517
        %623 = vmatpush.msra.mxu0 %v516
        %624 = vmatpush.msra.mxu0 %v515
        %625 = vmatpush.msra.mxu0 %v514
        %626 = vmatpush.msra.mxu0 %v513
        %627 = vmatpush.msra.mxu0 %v512
        %628 = vmatpush.msra.mxu0 %v511
        %629 = vmatpush.msra.mxu0 %v510
        %630 = vmatmul.f32.gmra.mxu0 %v519
        %v631 = vpop.f32.mrf.mxu0
        %v632 = vadd.f32 0.0, %v631
        %633 = vmatmul.f32.gmra.mxu0 %v522
        %v634 = vpop.f32.mrf.mxu0
        %v635 = vadd.f32 0.0, %v634
        %636 = vmatmul.f32.gmra.mxu0 %v525
        %v637 = vpop.f32.mrf.mxu0
        %v638 = vadd.f32 0.0, %v637
        %639 = vmatmul.f32.gmra.mxu0 %v528
        %v640 = vpop.f32.mrf.mxu0
        %v641 = vadd.f32 0.0, %v640
        %642 = vmatmul.f32.gmra.mxu0 %v531
        %v643 = vpop.f32.mrf.mxu0
        %v644 = vadd.f32 0.0, %v643
        %645 = vmatmul.f32.gmra.mxu0 %v534
        %v646 = vpop.f32.mrf.mxu0
        %v647 = vadd.f32 0.0, %v646
        %648 = vmatmul.f32.gmra.mxu0 %v537
        %v649 = vpop.f32.mrf.mxu0
        %v650 = vadd.f32 0.0, %v649
        %651 = vmatmul.f32.gmra.mxu0 %v540
        %v652 = vpop.f32.mrf.mxu0
        %v653 = vadd.f32 0.0, %v652
        %654 = vmatmul.f32.gmra.mxu0 %v543
        %v655 = vpop.f32.mrf.mxu0
        %v656 = vadd.f32 0.0, %v655
        %657 = vmatmul.f32.gmra.mxu0 %v546
        %v658 = vpop.f32.mrf.mxu0
        %v659 = vadd.f32 0.0, %v658
        %660 = vmatmul.f32.gmra.mxu0 %v549
        %v661 = vpop.f32.mrf.mxu0
        %v662 = vadd.f32 0.0, %v661
        %663 = vmatmul.f32.gmra.mxu0 %v552
        %v664 = vpop.f32.mrf.mxu0
        %v665 = vadd.f32 0.0, %v664
        %666 = vmatmul.f32.gmra.mxu0 %v555
        %v667 = vpop.f32.mrf.mxu0
        %v668 = vadd.f32 0.0, %v667
        %669 = vmatmul.f32.gmra.mxu0 %v558
        %v670 = vpop.f32.mrf.mxu0
        %v671 = vadd.f32 0.0, %v670
        %672 = vmatmul.f32.gmra.mxu0 %v561
        %v673 = vpop.f32.mrf.mxu0
        %v674 = vadd.f32 0.0, %v673
        %675 = vmatmul.f32.gmra.mxu0 %v564
        %v676 = vpop.f32.mrf.mxu0
        %v677 = vadd.f32 0.0, %v676
        %678 = vmatmul.f32.gmra.mxu0 %v567
        %v679 = vpop.f32.mrf.mxu0
        %v680 = vadd.f32 0.0, %v679
        %681 = vmatmul.f32.gmra.mxu0 %v570
        %v682 = vpop.f32.mrf.mxu0
        %v683 = vadd.f32 0.0, %v682
        %684 = vmatmul.f32.gmra.mxu0 %v573
        %v685 = vpop.f32.mrf.mxu0
        %v686 = vadd.f32 0.0, %v685
        %687 = vmatmul.f32.gmra.mxu0 %v576
        %v688 = vpop.f32.mrf.mxu0
        %v689 = vadd.f32 0.0, %v688
        %690 = vmatmul.f32.gmra.mxu0 %v579
        %v691 = vpop.f32.mrf.mxu0
        %v692 = vadd.f32 0.0, %v691
        %693 = vmatmul.f32.gmra.mxu0 %v582
        %v694 = vpop.f32.mrf.mxu0
        %v695 = vadd.f32 0.0, %v694
        %696 = vmatmul.f32.gmra.mxu0 %v585
        %v697 = vpop.f32.mrf.mxu0
        %v698 = vadd.f32 0.0, %v697
        %699 = vmatmul.f32.gmra.mxu0 %v588
        %v700 = vpop.f32.mrf.mxu0
        %v701 = vadd.f32 0.0, %v700
        %702 = vmatmul.f32.gmra.mxu0 %v591
        %v703 = vpop.f32.mrf.mxu0
        %v704 = vadd.f32 0.0, %v703
        %705 = vmatmul.f32.gmra.mxu0 %v594
        %v706 = vpop.f32.mrf.mxu0
        %v707 = vadd.f32 0.0, %v706
        %708 = vmatmul.f32.gmra.mxu0 %v597
        %v709 = vpop.f32.mrf.mxu0
        %v710 = vadd.f32 0.0, %v709
        %711 = vmatmul.f32.gmra.mxu0 %v600
        %v712 = vpop.f32.mrf.mxu0
        %v713 = vadd.f32 0.0, %v712
        %714 = vmatmul.f32.gmra.mxu0 %v603
        %v715 = vpop.f32.mrf.mxu0
        %v716 = vadd.f32 0.0, %v715
        %717 = vmatmul.f32.gmra.mxu0 %v606
        %v718 = vpop.f32.mrf.mxu0
        %v719 = vadd.f32 0.0, %v718
        %720 = vmatmul.f32.gmra.mxu0 %v609
        %v721 = vpop.f32.mrf.mxu0
        %v722 = vadd.f32 0.0, %v721
        %723 = vmatmul.f32.gmra.mxu0 %v612
        %v724 = vpop.f32.mrf.mxu0
        %v725 = vadd.f32 0.0, %v724
        %726 = vdwg.mxu0
        %v727 = vsub.f32 %v415, %v632
        %v728 = vsub.f32 %v418, %v635
        %v729 = vsub.f32 %v421, %v638
        %v730 = vsub.f32 %v424, %v641
        %v731 = vsub.f32 %v427, %v644
        %v732 = vsub.f32 %v430, %v647
        %v733 = vsub.f32 %v433, %v650
        %v734 = vsub.f32 %v436, %v653
        %v735 = vsub.f32 %v439, %v656
        %v736 = vsub.f32 %v442, %v659
        %v737 = vsub.f32 %v445, %v662
        %v738 = vsub.f32 %v448, %v665
        %v739 = vsub.f32 %v451, %v668
        %v740 = vsub.f32 %v454, %v671
        %v741 = vsub.f32 %v457, %v674
        %v742 = vsub.f32 %v460, %v677
        %v743 = vsub.f32 %v463, %v680
        %v744 = vsub.f32 %v466, %v683
        %v745 = vsub.f32 %v469, %v686
        %v746 = vsub.f32 %v472, %v689
        %v747 = vsub.f32 %v475, %v692
        %v748 = vsub.f32 %v478, %v695
        %v749 = vsub.f32 %v481, %v698
        %v750 = vsub.f32 %v484, %v701
        %v751 = vsub.f32 %v487, %v704
        %v752 = vsub.f32 %v490, %v707
        %v753 = vsub.f32 %v493, %v710
        %v754 = vsub.f32 %v496, %v713
        %v755 = vsub.f32 %v499, %v716
        %v756 = vsub.f32 %v502, %v719
        %v757 = vsub.f32 %v505, %v722
        %v758 = vsub.f32 %v508, %v725
        %v759 = vmul.f32 %v727, %v727
        %v760 = vmul.f32 %v728, %v728
        %v761 = vmul.f32 %v729, %v729
        %v762 = vmul.f32 %v730, %v730
        %v763 = vmul.f32 %v731, %v731
        %v764 = vmul.f32 %v732, %v732
        %v765 = vmul.f32 %v733, %v733
        %v766 = vmul.f32 %v734, %v734
        %v767 = vmul.f32 %v735, %v735
        %v768 = vmul.f32 %v736, %v736
        %v769 = vmul.f32 %v737, %v737
        %v770 = vmul.f32 %v738, %v738
        %v771 = vmul.f32 %v739, %v739
        %v772 = vmul.f32 %v740, %v740
        %v773 = vmul.f32 %v741, %v741
        %v774 = vmul.f32 %v742, %v742
        %v775 = vmul.f32 %v743, %v743
        %v776 = vmul.f32 %v744, %v744
        %v777 = vmul.f32 %v745, %v745
        %v778 = vmul.f32 %v746, %v746
        %v779 = vmul.f32 %v747, %v747
        %v780 = vmul.f32 %v748, %v748
        %v781 = vmul.f32 %v749, %v749
        %v782 = vmul.f32 %v750, %v750
        %v783 = vmul.f32 %v751, %v751
        %v784 = vmul.f32 %v752, %v752
        %v785 = vmul.f32 %v753, %v753
        %v786 = vmul.f32 %v754, %v754
        %v787 = vmul.f32 %v755, %v755
        %v788 = vmul.f32 %v756, %v756
        %v789 = vmul.f32 %v757, %v757
        %v790 = vmul.f32 %v758, %v758
        %v792 = vsel %vm300, %v759, 0
        %v795 = vsel %vm300, %v760, 0
        %v798 = vsel %vm300, %v761, 0
        %v801 = vsel %vm300, %v762, 0
        %v804 = vsel %vm300, %v763, 0
        %v807 = vsel %vm300, %v764, 0
        %v810 = vsel %vm300, %v765, 0
        %v813 = vsel %vm300, %v766, 0
        %v816 = vsel %vm300, %v767, 0
        %v819 = vsel %vm300, %v768, 0
        %v822 = vsel %vm300, %v769, 0
        %v825 = vsel %vm300, %v770, 0
        %v828 = vsel %vm300, %v771, 0
        %v831 = vsel %vm300, %v772, 0
        %v834 = vsel %vm300, %v773, 0
        %v837 = vsel %vm300, %v774, 0
        %v840 = vsel %vm300, %v775, 0
        %v843 = vsel %vm300, %v776, 0
        %v846 = vsel %vm300, %v777, 0
        %v849 = vsel %vm300, %v778, 0
        %v852 = vsel %vm300, %v779, 0
        %v855 = vsel %vm300, %v780, 0
        %v858 = vsel %vm300, %v781, 0
        %v861 = vsel %vm300, %v782, 0
        %v864 = vsel %vm300, %v783, 0
        %v867 = vsel %vm300, %v784, 0
        %v870 = vsel %vm300, %v785, 0
        %v873 = vsel %vm300, %v786, 0
        %v876 = vsel %vm300, %v787, 0
        %v879 = vsel %vm300, %v788, 0
        %v882 = vsel %vm300, %v789, 0
        %v885 = vsel %vm300, %v790, 0
        %887 = vmatpush.msra.mxu0 0.0
        %888 = vmatpush.msra.mxu0 0.0
        %889 = vmatpush.msra.mxu0 0.0
        %890 = vmatpush.msra.mxu0 0.0
        %891 = vmatpush.msra.mxu0 0.0
        %892 = vmatpush.msra.mxu0 0.0
        %893 = vmatpush.msra.mxu0 0.0
        %894 = vmatpush.msra.mxu0 0.0
        %895 = vmatpush.msra.mxu0 %v517
        %896 = vmatpush.msra.mxu0 %v516
        %897 = vmatpush.msra.mxu0 %v515
        %898 = vmatpush.msra.mxu0 %v514
        %899 = vmatpush.msra.mxu0 %v513
        %900 = vmatpush.msra.mxu0 %v512
        %901 = vmatpush.msra.mxu0 %v511
        %902 = vmatpush.msra.mxu0 %v510
        %903 = vmatmul.f32.gmra.mxu0 %v792
        %v904 = vpop.f32.mrf.mxu0
        %v905 = vadd.f32 1e-05, %v904
        %906 = vmatmul.f32.gmra.mxu0 %v795
        %v907 = vpop.f32.mrf.mxu0
        %v908 = vadd.f32 1e-05, %v907
        %909 = vmatmul.f32.gmra.mxu0 %v798
        %v910 = vpop.f32.mrf.mxu0
        %v911 = vadd.f32 1e-05, %v910
        %912 = vmatmul.f32.gmra.mxu0 %v801
        %v913 = vpop.f32.mrf.mxu0
        %v914 = vadd.f32 1e-05, %v913
        %915 = vmatmul.f32.gmra.mxu0 %v804
        %v916 = vpop.f32.mrf.mxu0
        %v917 = vadd.f32 1e-05, %v916
        %918 = vmatmul.f32.gmra.mxu0 %v807
        %v919 = vpop.f32.mrf.mxu0
        %v920 = vadd.f32 1e-05, %v919
        %921 = vmatmul.f32.gmra.mxu0 %v810
        %v922 = vpop.f32.mrf.mxu0
        %v923 = vadd.f32 1e-05, %v922
        %924 = vmatmul.f32.gmra.mxu0 %v813
        %v925 = vpop.f32.mrf.mxu0
        %v926 = vadd.f32 1e-05, %v925
        %927 = vmatmul.f32.gmra.mxu0 %v816
        %v928 = vpop.f32.mrf.mxu0
        %v929 = vadd.f32 1e-05, %v928
        %930 = vmatmul.f32.gmra.mxu0 %v819
        %v931 = vpop.f32.mrf.mxu0
        %v932 = vadd.f32 1e-05, %v931
        %933 = vmatmul.f32.gmra.mxu0 %v822
        %v934 = vpop.f32.mrf.mxu0
        %v935 = vadd.f32 1e-05, %v934
        %936 = vmatmul.f32.gmra.mxu0 %v825
        %v937 = vpop.f32.mrf.mxu0
        %v938 = vadd.f32 1e-05, %v937
        %939 = vmatmul.f32.gmra.mxu0 %v828
        %v940 = vpop.f32.mrf.mxu0
        %v941 = vadd.f32 1e-05, %v940
        %942 = vmatmul.f32.gmra.mxu0 %v831
        %v943 = vpop.f32.mrf.mxu0
        %v944 = vadd.f32 1e-05, %v943
        %945 = vmatmul.f32.gmra.mxu0 %v834
        %v946 = vpop.f32.mrf.mxu0
        %v947 = vadd.f32 1e-05, %v946
        %948 = vmatmul.f32.gmra.mxu0 %v837
        %v949 = vpop.f32.mrf.mxu0
        %v950 = vadd.f32 1e-05, %v949
        %951 = vmatmul.f32.gmra.mxu0 %v840
        %v952 = vpop.f32.mrf.mxu0
        %v953 = vadd.f32 1e-05, %v952
        %954 = vmatmul.f32.gmra.mxu0 %v843
        %v955 = vpop.f32.mrf.mxu0
        %v956 = vadd.f32 1e-05, %v955
        %957 = vmatmul.f32.gmra.mxu0 %v846
        %v958 = vpop.f32.mrf.mxu0
        %v959 = vadd.f32 1e-05, %v958
        %960 = vmatmul.f32.gmra.mxu0 %v849
        %v961 = vpop.f32.mrf.mxu0
        %v962 = vadd.f32 1e-05, %v961
        %963 = vmatmul.f32.gmra.mxu0 %v852
        %v964 = vpop.f32.mrf.mxu0
        %v965 = vadd.f32 1e-05, %v964
        %966 = vmatmul.f32.gmra.mxu0 %v855
        %v967 = vpop.f32.mrf.mxu0
        %v968 = vadd.f32 1e-05, %v967
        %969 = vmatmul.f32.gmra.mxu0 %v858
        %v970 = vpop.f32.mrf.mxu0
        %v971 = vadd.f32 1e-05, %v970
        %972 = vmatmul.f32.gmra.mxu0 %v861
        %v973 = vpop.f32.mrf.mxu0
        %v974 = vadd.f32 1e-05, %v973
        %975 = vmatmul.f32.gmra.mxu0 %v864
        %v976 = vpop.f32.mrf.mxu0
        %v977 = vadd.f32 1e-05, %v976
        %978 = vmatmul.f32.gmra.mxu0 %v867
        %v979 = vpop.f32.mrf.mxu0
        %v980 = vadd.f32 1e-05, %v979
        %981 = vmatmul.f32.gmra.mxu0 %v870
        %v982 = vpop.f32.mrf.mxu0
        %v983 = vadd.f32 1e-05, %v982
        %984 = vmatmul.f32.gmra.mxu0 %v873
        %v985 = vpop.f32.mrf.mxu0
        %v986 = vadd.f32 1e-05, %v985
        %987 = vmatmul.f32.gmra.mxu0 %v876
        %v988 = vpop.f32.mrf.mxu0
        %v989 = vadd.f32 1e-05, %v988
        %990 = vmatmul.f32.gmra.mxu0 %v879
        %v991 = vpop.f32.mrf.mxu0
        %v992 = vadd.f32 1e-05, %v991
        %993 = vmatmul.f32.gmra.mxu0 %v882
        %v994 = vpop.f32.mrf.mxu0
        %v995 = vadd.f32 1e-05, %v994
        %996 = vmatmul.f32.gmra.mxu0 %v885
        %v997 = vpop.f32.mrf.mxu0
        %v998 = vadd.f32 1e-05, %v997
        %999 = vdwg.mxu0
        %v1000 = vrsqrt.pop %v905
        %v1001 = vmul.f32 %v1000, %v905
        %v1002 = vmul.f32 %v1001, %v1000
        %v1003 = vmul.f32 0.5, %v1002
        %v1004 = vsub.f32 1.5, %v1003
        %v1005 = vmul.f32 %v1000, %v1004
        %vm1006 = vweird.f32 %v905
        %vm1007 = vweird.f32 %v1000
        %vm1008 = vmor %vm1006, %vm1007
        %v1009 = vsel %vm1008, %v1000, %v1005
        %v1010 = vrsqrt.pop %v908
        %v1011 = vmul.f32 %v1010, %v908
        %v1012 = vmul.f32 %v1011, %v1010
        %v1013 = vmul.f32 0.5, %v1012
        %v1014 = vsub.f32 1.5, %v1013
        %v1015 = vmul.f32 %v1010, %v1014
        %vm1016 = vweird.f32 %v908
        %vm1017 = vweird.f32 %v1010
        %vm1018 = vmor %vm1016, %vm1017
        %v1019 = vsel %vm1018, %v1010, %v1015
        %v1020 = vrsqrt.pop %v911
        %v1021 = vmul.f32 %v1020, %v911
        %v1022 = vmul.f32 %v1021, %v1020
        %v1023 = vmul.f32 0.5, %v1022
        %v1024 = vsub.f32 1.5, %v1023
        %v1025 = vmul.f32 %v1020, %v1024
        %vm1026 = vweird.f32 %v911
        %vm1027 = vweird.f32 %v1020
        %vm1028 = vmor %vm1026, %vm1027
        %v1029 = vsel %vm1028, %v1020, %v1025
        %v1030 = vrsqrt.pop %v914
        %v1031 = vmul.f32 %v1030, %v914
        %v1032 = vmul.f32 %v1031, %v1030
        %v1033 = vmul.f32 0.5, %v1032
        %v1034 = vsub.f32 1.5, %v1033
        %v1035 = vmul.f32 %v1030, %v1034
        %vm1036 = vweird.f32 %v914
        %vm1037 = vweird.f32 %v1030
        %vm1038 = vmor %vm1036, %vm1037
        %v1039 = vsel %vm1038, %v1030, %v1035
        %v1040 = vrsqrt.pop %v917
        %v1041 = vmul.f32 %v1040, %v917
        %v1042 = vmul.f32 %v1041, %v1040
        %v1043 = vmul.f32 0.5, %v1042
        %v1044 = vsub.f32 1.5, %v1043
        %v1045 = vmul.f32 %v1040, %v1044
        %vm1046 = vweird.f32 %v917
        %vm1047 = vweird.f32 %v1040
        %vm1048 = vmor %vm1046, %vm1047
        %v1049 = vsel %vm1048, %v1040, %v1045
        %v1050 = vrsqrt.pop %v920
        %v1051 = vmul.f32 %v1050, %v920
        %v1052 = vmul.f32 %v1051, %v1050
        %v1053 = vmul.f32 0.5, %v1052
        %v1054 = vsub.f32 1.5, %v1053
        %v1055 = vmul.f32 %v1050, %v1054
        %vm1056 = vweird.f32 %v920
        %vm1057 = vweird.f32 %v1050
        %vm1058 = vmor %vm1056, %vm1057
        %v1059 = vsel %vm1058, %v1050, %v1055
        %v1060 = vrsqrt.pop %v923
        %v1061 = vmul.f32 %v1060, %v923
        %v1062 = vmul.f32 %v1061, %v1060
        %v1063 = vmul.f32 0.5, %v1062
        %v1064 = vsub.f32 1.5, %v1063
        %v1065 = vmul.f32 %v1060, %v1064
        %vm1066 = vweird.f32 %v923
        %vm1067 = vweird.f32 %v1060
        %vm1068 = vmor %vm1066, %vm1067
        %v1069 = vsel %vm1068, %v1060, %v1065
        %v1070 = vrsqrt.pop %v926
        %v1071 = vmul.f32 %v1070, %v926
        %v1072 = vmul.f32 %v1071, %v1070
        %v1073 = vmul.f32 0.5, %v1072
        %v1074 = vsub.f32 1.5, %v1073
        %v1075 = vmul.f32 %v1070, %v1074
        %vm1076 = vweird.f32 %v926
        %vm1077 = vweird.f32 %v1070
        %vm1078 = vmor %vm1076, %vm1077
        %v1079 = vsel %vm1078, %v1070, %v1075
        %v1080 = vrsqrt.pop %v929
        %v1081 = vmul.f32 %v1080, %v929
        %v1082 = vmul.f32 %v1081, %v1080
        %v1083 = vmul.f32 0.5, %v1082
        %v1084 = vsub.f32 1.5, %v1083
        %v1085 = vmul.f32 %v1080, %v1084
        %vm1086 = vweird.f32 %v929
        %vm1087 = vweird.f32 %v1080
        %vm1088 = vmor %vm1086, %vm1087
        %v1089 = vsel %vm1088, %v1080, %v1085
        %v1090 = vrsqrt.pop %v932
        %v1091 = vmul.f32 %v1090, %v932
        %v1092 = vmul.f32 %v1091, %v1090
        %v1093 = vmul.f32 0.5, %v1092
        %v1094 = vsub.f32 1.5, %v1093
        %v1095 = vmul.f32 %v1090, %v1094
        %vm1096 = vweird.f32 %v932
        %vm1097 = vweird.f32 %v1090
        %vm1098 = vmor %vm1096, %vm1097
        %v1099 = vsel %vm1098, %v1090, %v1095
        %v1100 = vrsqrt.pop %v935
        %v1101 = vmul.f32 %v1100, %v935
        %v1102 = vmul.f32 %v1101, %v1100
        %v1103 = vmul.f32 0.5, %v1102
        %v1104 = vsub.f32 1.5, %v1103
        %v1105 = vmul.f32 %v1100, %v1104
        %vm1106 = vweird.f32 %v935
        %vm1107 = vweird.f32 %v1100
        %vm1108 = vmor %vm1106, %vm1107
        %v1109 = vsel %vm1108, %v1100, %v1105
        %v1110 = vrsqrt.pop %v938
        %v1111 = vmul.f32 %v1110, %v938
        %v1112 = vmul.f32 %v1111, %v1110
        %v1113 = vmul.f32 0.5, %v1112
        %v1114 = vsub.f32 1.5, %v1113
        %v1115 = vmul.f32 %v1110, %v1114
        %vm1116 = vweird.f32 %v938
        %vm1117 = vweird.f32 %v1110
        %vm1118 = vmor %vm1116, %vm1117
        %v1119 = vsel %vm1118, %v1110, %v1115
        %v1120 = vrsqrt.pop %v941
        %v1121 = vmul.f32 %v1120, %v941
        %v1122 = vmul.f32 %v1121, %v1120
        %v1123 = vmul.f32 0.5, %v1122
        %v1124 = vsub.f32 1.5, %v1123
        %v1125 = vmul.f32 %v1120, %v1124
        %vm1126 = vweird.f32 %v941
        %vm1127 = vweird.f32 %v1120
        %vm1128 = vmor %vm1126, %vm1127
        %v1129 = vsel %vm1128, %v1120, %v1125
        %v1130 = vrsqrt.pop %v944
        %v1131 = vmul.f32 %v1130, %v944
        %v1132 = vmul.f32 %v1131, %v1130
        %v1133 = vmul.f32 0.5, %v1132
        %v1134 = vsub.f32 1.5, %v1133
        %v1135 = vmul.f32 %v1130, %v1134
        %vm1136 = vweird.f32 %v944
        %vm1137 = vweird.f32 %v1130
        %vm1138 = vmor %vm1136, %vm1137
        %v1139 = vsel %vm1138, %v1130, %v1135
        %v1140 = vrsqrt.pop %v947
        %v1141 = vmul.f32 %v1140, %v947
        %v1142 = vmul.f32 %v1141, %v1140
        %v1143 = vmul.f32 0.5, %v1142
        %v1144 = vsub.f32 1.5, %v1143
        %v1145 = vmul.f32 %v1140, %v1144
        %vm1146 = vweird.f32 %v947
        %vm1147 = vweird.f32 %v1140
        %vm1148 = vmor %vm1146, %vm1147
        %v1149 = vsel %vm1148, %v1140, %v1145
        %v1150 = vrsqrt.pop %v950
        %v1151 = vmul.f32 %v1150, %v950
        %v1152 = vmul.f32 %v1151, %v1150
        %v1153 = vmul.f32 0.5, %v1152
        %v1154 = vsub.f32 1.5, %v1153
        %v1155 = vmul.f32 %v1150, %v1154
        %vm1156 = vweird.f32 %v950
        %vm1157 = vweird.f32 %v1150
        %vm1158 = vmor %vm1156, %vm1157
        %v1159 = vsel %vm1158, %v1150, %v1155
        %v1160 = vrsqrt.pop %v953
        %v1161 = vmul.f32 %v1160, %v953
        %v1162 = vmul.f32 %v1161, %v1160
        %v1163 = vmul.f32 0.5, %v1162
        %v1164 = vsub.f32 1.5, %v1163
        %v1165 = vmul.f32 %v1160, %v1164
        %vm1166 = vweird.f32 %v953
        %vm1167 = vweird.f32 %v1160
        %vm1168 = vmor %vm1166, %vm1167
        %v1169 = vsel %vm1168, %v1160, %v1165
        %v1170 = vrsqrt.pop %v956
        %v1171 = vmul.f32 %v1170, %v956
        %v1172 = vmul.f32 %v1171, %v1170
        %v1173 = vmul.f32 0.5, %v1172
        %v1174 = vsub.f32 1.5, %v1173
        %v1175 = vmul.f32 %v1170, %v1174
        %vm1176 = vweird.f32 %v956
        %vm1177 = vweird.f32 %v1170
        %vm1178 = vmor %vm1176, %vm1177
        %v1179 = vsel %vm1178, %v1170, %v1175
        %v1180 = vrsqrt.pop %v959
        %v1181 = vmul.f32 %v1180, %v959
        %v1182 = vmul.f32 %v1181, %v1180
        %v1183 = vmul.f32 0.5, %v1182
        %v1184 = vsub.f32 1.5, %v1183
        %v1185 = vmul.f32 %v1180, %v1184
        %vm1186 = vweird.f32 %v959
        %vm1187 = vweird.f32 %v1180
        %vm1188 = vmor %vm1186, %vm1187
        %v1189 = vsel %vm1188, %v1180, %v1185
        %v1190 = vrsqrt.pop %v962
        %v1191 = vmul.f32 %v1190, %v962
        %v1192 = vmul.f32 %v1191, %v1190
        %v1193 = vmul.f32 0.5, %v1192
        %v1194 = vsub.f32 1.5, %v1193
        %v1195 = vmul.f32 %v1190, %v1194
        %vm1196 = vweird.f32 %v962
        %vm1197 = vweird.f32 %v1190
        %vm1198 = vmor %vm1196, %vm1197
        %v1199 = vsel %vm1198, %v1190, %v1195
        %v1200 = vrsqrt.pop %v965
        %v1201 = vmul.f32 %v1200, %v965
        %v1202 = vmul.f32 %v1201, %v1200
        %v1203 = vmul.f32 0.5, %v1202
        %v1204 = vsub.f32 1.5, %v1203
        %v1205 = vmul.f32 %v1200, %v1204
        %vm1206 = vweird.f32 %v965
        %vm1207 = vweird.f32 %v1200
        %vm1208 = vmor %vm1206, %vm1207
        %v1209 = vsel %vm1208, %v1200, %v1205
        %v1210 = vrsqrt.pop %v968
        %v1211 = vmul.f32 %v1210, %v968
        %v1212 = vmul.f32 %v1211, %v1210
        %v1213 = vmul.f32 0.5, %v1212
        %v1214 = vsub.f32 1.5, %v1213
        %v1215 = vmul.f32 %v1210, %v1214
        %vm1216 = vweird.f32 %v968
        %vm1217 = vweird.f32 %v1210
        %vm1218 = vmor %vm1216, %vm1217
        %v1219 = vsel %vm1218, %v1210, %v1215
        %v1220 = vrsqrt.pop %v971
        %v1221 = vmul.f32 %v1220, %v971
        %v1222 = vmul.f32 %v1221, %v1220
        %v1223 = vmul.f32 0.5, %v1222
        %v1224 = vsub.f32 1.5, %v1223
        %v1225 = vmul.f32 %v1220, %v1224
        %vm1226 = vweird.f32 %v971
        %vm1227 = vweird.f32 %v1220
        %vm1228 = vmor %vm1226, %vm1227
        %v1229 = vsel %vm1228, %v1220, %v1225
        %v1230 = vrsqrt.pop %v974
        %v1231 = vmul.f32 %v1230, %v974
        %v1232 = vmul.f32 %v1231, %v1230
        %v1233 = vmul.f32 0.5, %v1232
        %v1234 = vsub.f32 1.5, %v1233
        %v1235 = vmul.f32 %v1230, %v1234
        %vm1236 = vweird.f32 %v974
        %vm1237 = vweird.f32 %v1230
        %vm1238 = vmor %vm1236, %vm1237
        %v1239 = vsel %vm1238, %v1230, %v1235
        %v1240 = vrsqrt.pop %v977
        %v1241 = vmul.f32 %v1240, %v977
        %v1242 = vmul.f32 %v1241, %v1240
        %v1243 = vmul.f32 0.5, %v1242
        %v1244 = vsub.f32 1.5, %v1243
        %v1245 = vmul.f32 %v1240, %v1244
        %vm1246 = vweird.f32 %v977
        %vm1247 = vweird.f32 %v1240
        %vm1248 = vmor %vm1246, %vm1247
        %v1249 = vsel %vm1248, %v1240, %v1245
        %v1250 = vrsqrt.pop %v980
        %v1251 = vmul.f32 %v1250, %v980
        %v1252 = vmul.f32 %v1251, %v1250
        %v1253 = vmul.f32 0.5, %v1252
        %v1254 = vsub.f32 1.5, %v1253
        %v1255 = vmul.f32 %v1250, %v1254
        %vm1256 = vweird.f32 %v980
        %vm1257 = vweird.f32 %v1250
        %vm1258 = vmor %vm1256, %vm1257
        %v1259 = vsel %vm1258, %v1250, %v1255
        %v1260 = vrsqrt.pop %v983
        %v1261 = vmul.f32 %v1260, %v983
        %v1262 = vmul.f32 %v1261, %v1260
        %v1263 = vmul.f32 0.5, %v1262
        %v1264 = vsub.f32 1.5, %v1263
        %v1265 = vmul.f32 %v1260, %v1264
        %vm1266 = vweird.f32 %v983
        %vm1267 = vweird.f32 %v1260
        %vm1268 = vmor %vm1266, %vm1267
        %v1269 = vsel %vm1268, %v1260, %v1265
        %v1270 = vrsqrt.pop %v986
        %v1271 = vmul.f32 %v1270, %v986
        %v1272 = vmul.f32 %v1271, %v1270
        %v1273 = vmul.f32 0.5, %v1272
        %v1274 = vsub.f32 1.5, %v1273
        %v1275 = vmul.f32 %v1270, %v1274
        %vm1276 = vweird.f32 %v986
        %vm1277 = vweird.f32 %v1270
        %vm1278 = vmor %vm1276, %vm1277
        %v1279 = vsel %vm1278, %v1270, %v1275
        %v1280 = vrsqrt.pop %v989
        %v1281 = vmul.f32 %v1280, %v989
        %v1282 = vmul.f32 %v1281, %v1280
        %v1283 = vmul.f32 0.5, %v1282
        %v1284 = vsub.f32 1.5, %v1283
        %v1285 = vmul.f32 %v1280, %v1284
        %vm1286 = vweird.f32 %v989
        %vm1287 = vweird.f32 %v1280
        %vm1288 = vmor %vm1286, %vm1287
        %v1289 = vsel %vm1288, %v1280, %v1285
        %v1290 = vrsqrt.pop %v992
        %v1291 = vmul.f32 %v1290, %v992
        %v1292 = vmul.f32 %v1291, %v1290
        %v1293 = vmul.f32 0.5, %v1292
        %v1294 = vsub.f32 1.5, %v1293
        %v1295 = vmul.f32 %v1290, %v1294
        %vm1296 = vweird.f32 %v992
        %vm1297 = vweird.f32 %v1290
        %vm1298 = vmor %vm1296, %vm1297
        %v1299 = vsel %vm1298, %v1290, %v1295
        %v1300 = vrsqrt.pop %v995
        %v1301 = vmul.f32 %v1300, %v995
        %v1302 = vmul.f32 %v1301, %v1300
        %v1303 = vmul.f32 0.5, %v1302
        %v1304 = vsub.f32 1.5, %v1303
        %v1305 = vmul.f32 %v1300, %v1304
        %vm1306 = vweird.f32 %v995
        %vm1307 = vweird.f32 %v1300
        %vm1308 = vmor %vm1306, %vm1307
        %v1309 = vsel %vm1308, %v1300, %v1305
        %v1310 = vrsqrt.pop %v998
        %v1311 = vmul.f32 %v1310, %v998
        %v1312 = vmul.f32 %v1311, %v1310
        %v1313 = vmul.f32 0.5, %v1312
        %v1314 = vsub.f32 1.5, %v1313
        %v1315 = vmul.f32 %v1310, %v1314
        %vm1316 = vweird.f32 %v998
        %vm1317 = vweird.f32 %v1310
        %vm1318 = vmor %vm1316, %vm1317
        %v1319 = vsel %vm1318, %v1310, %v1315
        %v1320 = vmul.f32 %v727, %v1009
        %v1321 = vmul.f32 %v728, %v1019
        %v1322 = vmul.f32 %v729, %v1029
        %v1323 = vmul.f32 %v730, %v1039
        %v1324 = vmul.f32 %v731, %v1049
        %v1325 = vmul.f32 %v732, %v1059
        %v1326 = vmul.f32 %v733, %v1069
        %v1327 = vmul.f32 %v734, %v1079
        %v1328 = vmul.f32 %v735, %v1089
        %v1329 = vmul.f32 %v736, %v1099
        %v1330 = vmul.f32 %v737, %v1109
        %v1331 = vmul.f32 %v738, %v1119
        %v1332 = vmul.f32 %v739, %v1129
        %v1333 = vmul.f32 %v740, %v1139
        %v1334 = vmul.f32 %v741, %v1149
        %v1335 = vmul.f32 %v742, %v1159
        %v1336 = vmul.f32 %v743, %v1169
        %v1337 = vmul.f32 %v744, %v1179
        %v1338 = vmul.f32 %v745, %v1189
        %v1339 = vmul.f32 %v746, %v1199
        %v1340 = vmul.f32 %v747, %v1209
        %v1341 = vmul.f32 %v748, %v1219
        %v1342 = vmul.f32 %v749, %v1229
        %v1343 = vmul.f32 %v750, %v1239
        %v1344 = vmul.f32 %v751, %v1249
        %v1345 = vmul.f32 %v752, %v1259
        %v1346 = vmul.f32 %v753, %v1269
        %v1347 = vmul.f32 %v754, %v1279
        %v1348 = vmul.f32 %v755, %v1289
        %v1349 = vmul.f32 %v756, %v1299
        %v1350 = vmul.f32 %v757, %v1309
        %v1351 = vmul.f32 %v758, %v1319
        %v1352 = vld [vmem:[%s3] sm:$0x1]
        %v1354 = vperm.slane %v1352, 0
        %v1356 = vmul.f32 %v1320, %v1354
        %v1357 = vmul.f32 %v1321, %v1354
        %v1358 = vmul.f32 %v1322, %v1354
        %v1359 = vmul.f32 %v1323, %v1354
        %v1360 = vmul.f32 %v1324, %v1354
        %v1361 = vmul.f32 %v1325, %v1354
        %v1362 = vmul.f32 %v1326, %v1354
        %v1363 = vmul.f32 %v1327, %v1354
        %v1364 = vmul.f32 %v1328, %v1354
        %v1365 = vmul.f32 %v1329, %v1354
        %v1366 = vmul.f32 %v1330, %v1354
        %v1367 = vmul.f32 %v1331, %v1354
        %v1368 = vmul.f32 %v1332, %v1354
        %v1369 = vmul.f32 %v1333, %v1354
        %v1370 = vmul.f32 %v1334, %v1354
        %v1371 = vmul.f32 %v1335, %v1354
        %v1372 = vmul.f32 %v1336, %v1354
        %v1373 = vmul.f32 %v1337, %v1354
        %v1374 = vmul.f32 %v1338, %v1354
        %v1375 = vmul.f32 %v1339, %v1354
        %v1376 = vmul.f32 %v1340, %v1354
        %v1377 = vmul.f32 %v1341, %v1354
        %v1378 = vmul.f32 %v1342, %v1354
        %v1379 = vmul.f32 %v1343, %v1354
        %v1380 = vmul.f32 %v1344, %v1354
        %v1381 = vmul.f32 %v1345, %v1354
        %v1382 = vmul.f32 %v1346, %v1354
        %v1383 = vmul.f32 %v1347, %v1354
        %v1384 = vmul.f32 %v1348, %v1354
        %v1385 = vmul.f32 %v1349, %v1354
        %v1386 = vmul.f32 %v1350, %v1354
        %v1387 = vmul.f32 %v1351, %v1354
        %v1388 = vld [vmem:[%s4] sm:$0x1]
        %v1390 = vperm.slane %v1388, 0
        %v1392 = vadd.f32 %v1356, %v1390
        %v1393 = vadd.f32 %v1357, %v1390
        %v1394 = vadd.f32 %v1358, %v1390
        %v1395 = vadd.f32 %v1359, %v1390
        %v1396 = vadd.f32 %v1360, %v1390
        %v1397 = vadd.f32 %v1361, %v1390
        %v1398 = vadd.f32 %v1362, %v1390
        %v1399 = vadd.f32 %v1363, %v1390
        %v1400 = vadd.f32 %v1364, %v1390
        %v1401 = vadd.f32 %v1365, %v1390
        %v1402 = vadd.f32 %v1366, %v1390
        %v1403 = vadd.f32 %v1367, %v1390
        %v1404 = vadd.f32 %v1368, %v1390
        %v1405 = vadd.f32 %v1369, %v1390
        %v1406 = vadd.f32 %v1370, %v1390
        %v1407 = vadd.f32 %v1371, %v1390
        %v1408 = vadd.f32 %v1372, %v1390
        %v1409 = vadd.f32 %v1373, %v1390
        %v1410 = vadd.f32 %v1374, %v1390
        %v1411 = vadd.f32 %v1375, %v1390
        %v1412 = vadd.f32 %v1376, %v1390
        %v1413 = vadd.f32 %v1377, %v1390
        %v1414 = vadd.f32 %v1378, %v1390
        %v1415 = vadd.f32 %v1379, %v1390
        %v1416 = vadd.f32 %v1380, %v1390
        %v1417 = vadd.f32 %v1381, %v1390
        %v1418 = vadd.f32 %v1382, %v1390
        %v1419 = vadd.f32 %v1383, %v1390
        %v1420 = vadd.f32 %v1384, %v1390
        %v1421 = vadd.f32 %v1385, %v1390
        %v1422 = vadd.f32 %v1386, %v1390
        %v1423 = vadd.f32 %v1387, %v1390
        %1424 = vst.msk [vmem:[%s247] sm:$0xff] %vm300, %v1392
        %1425 = vst.msk [vmem:[%s247 + $0x8] sm:$0xff] %vm300, %v1393
        %1426 = vst.msk [vmem:[%s247 + $0x10] sm:$0xff] %vm300, %v1394
        %1427 = vst.msk [vmem:[%s247 + $0x18] sm:$0xff] %vm300, %v1395
        %1428 = vst.msk [vmem:[%s247 + $0x20] sm:$0xff] %vm300, %v1396
        %1429 = vst.msk [vmem:[%s247 + $0x28] sm:$0xff] %vm300, %v1397
        %1430 = vst.msk [vmem:[%s247 + $0x30] sm:$0xff] %vm300, %v1398
        %1431 = vst.msk [vmem:[%s247 + $0x38] sm:$0xff] %vm300, %v1399
        %1432 = vst.msk [vmem:[%s247 + $0x40] sm:$0xff] %vm300, %v1400
        %1433 = vst.msk [vmem:[%s247 + $0x48] sm:$0xff] %vm300, %v1401
        %1434 = vst.msk [vmem:[%s247 + $0x50] sm:$0xff] %vm300, %v1402
        %1435 = vst.msk [vmem:[%s247 + $0x58] sm:$0xff] %vm300, %v1403
        %1436 = vst.msk [vmem:[%s247 + $0x60] sm:$0xff] %vm300, %v1404
        %1437 = vst.msk [vmem:[%s247 + $0x68] sm:$0xff] %vm300, %v1405
        %1438 = vst.msk [vmem:[%s247 + $0x70] sm:$0xff] %vm300, %v1406
        %1439 = vst.msk [vmem:[%s247 + $0x78] sm:$0xff] %vm300, %v1407
        %1440 = vst.msk [vmem:[%s247 + $0x80] sm:$0xff] %vm300, %v1408
        %1441 = vst.msk [vmem:[%s247 + $0x88] sm:$0xff] %vm300, %v1409
        %1442 = vst.msk [vmem:[%s247 + $0x90] sm:$0xff] %vm300, %v1410
        %1443 = vst.msk [vmem:[%s247 + $0x98] sm:$0xff] %vm300, %v1411
        %1444 = vst.msk [vmem:[%s247 + $0xa0] sm:$0xff] %vm300, %v1412
        %1445 = vst.msk [vmem:[%s247 + $0xa8] sm:$0xff] %vm300, %v1413
        %1446 = vst.msk [vmem:[%s247 + $0xb0] sm:$0xff] %vm300, %v1414
        %1447 = vst.msk [vmem:[%s247 + $0xb8] sm:$0xff] %vm300, %v1415
        %1448 = vst.msk [vmem:[%s247 + $0xc0] sm:$0xff] %vm300, %v1416
        %1449 = vst.msk [vmem:[%s247 + $0xc8] sm:$0xff] %vm300, %v1417
        %1450 = vst.msk [vmem:[%s247 + $0xd0] sm:$0xff] %vm300, %v1418
        %1451 = vst.msk [vmem:[%s247 + $0xd8] sm:$0xff] %vm300, %v1419
        %1452 = vst.msk [vmem:[%s247 + $0xe0] sm:$0xff] %vm300, %v1420
        %1453 = vst.msk [vmem:[%s247 + $0xe8] sm:$0xff] %vm300, %v1421
        %1454 = vst.msk [vmem:[%s247 + $0xf0] sm:$0xff] %vm300, %v1422
        %1455 = vst.msk [vmem:[%s247 + $0xf8] sm:$0xff] %vm300, %v1423
        %s1456 = sand.u32 %s156, 1
        %s1457 = scalar_lea.sflag [#allocation3], %s1456
        %s1458 = sand.u32 %s156, 1
        %s1459 = smul.addr %s1458, 256
        %s1460 = scalar_lea.vmem [#allocation2], %s1459
        // Predicated region
        $region41: #{tpu_custom_call.1} parent=39 // pred_check
          %p1461 = pneg %p166
        $region42: #{tpu_custom_call.1} parent=39 // pred_check_branch
          %1463 = sbr.rel (%p1461) target = $region44
        $region43: #{tpu_custom_call.1} parent=39 // pred_region
          #allocation5 [shape = 'u32[6]{0}', space=smem, size = 0x18, scoped, tag = 'DMA stride descriptor']
          %s1464 = smul.u32 16, %s23
          %1466 = vsyncadd %s1457, 0
          %s1467 = smul.addr %s24, 2
          %s1468 = smul.addr %s1464, 8
          %s1469 = sadd.s32 %s1467, %s1468
          %s1470 = smul.addr %s1469, 8
          %s1471 = scalar_lea.hbm %s5, %s1470
          %s1473 = sshll.u32 1, 14
          %s1474 = sxor.u32 4294967295, %s1473
          %s1477 = sshll.u32 7, 18
          %s1478 = sxor.u32 4294967295, %s1477
          %s1479 = sand.u32 0, %s1478
          %s1481 = sor.u32 %s1479, 0
          %s1482 = sshll.u32 %s1460, 4
          %s1483 = int_to_ptr.vmem [resolvable:$true] %s1482
          %s1484 = sshll.u32 %s1471, 4
          %s1485 = int_to_ptr.hbm [resolvable:$true] %s1484
          %1491 = sst [smem:[#allocation5]] 256
          %s1492 = scalar_lea.smem [#allocation5], 1
          %1493 = sst [smem:[%s1492]] 1024
          %s1494 = scalar_lea.smem [#allocation5], 2
          %1495 = sst [smem:[%s1494]] 2
          %s1496 = scalar_lea.smem [#allocation5], 3
          %1497 = sst [smem:[%s1496]] 128
          %s1498 = scalar_lea.smem [#allocation5], 4
          %1499 = sst [smem:[%s1498]] 128
          %s1500 = scalar_lea.smem [#allocation5], 5
          %1501 = sst [smem:[%s1500]] 8
          %1503 = dma.general %s1483, 4096, %s1485, %s1457, [#allocation4], [#allocation5], %s1481, 0
        $region44: #{tpu_custom_call.1} parent=39 // pred_fallthru
          _
      $region40: #{tpu_custom_call.1} parent=5 // pred_fallthru
        _
      %p1504 = scmp.le.s32.totalorder 2, %s14
      // Predicated region
      $region45: #{tpu_custom_call.1} parent=5 // pred_check
        %p1505 = pneg %p1504
      $region46: #{tpu_custom_call.1} parent=5 // pred_check_branch
        %1507 = sbr.rel (%p1505) target = $region48
      $region47: #{tpu_custom_call.1} parent=5 // pred_region
        %s1508 = ssub.s32 %s14, 2
        // Predicated region
        $region49: #{tpu_custom_call.1} parent=47 // pred_check
          %p1509 = pneg %p172
        $region50: #{tpu_custom_call.1} parent=47 // pred_check_branch
          %1511 = sbr.rel (%p1509) target = $region52
        $region51: #{tpu_custom_call.1} parent=47 // pred_region
          %s1512 = sand.u32 %s157, 1
          %s1513 = scalar_lea.sflag [#allocation3], %s1512
          %s1514 = sand.u32 %s157, 1
          %s1515 = smul.addr %s1514, 256
          %s1516 = scalar_lea.vmem [#allocation2], %s1515
          %1518 = dma.done %s1513, 4096
        $region52: #{tpu_custom_call.1} parent=47 // pred_fallthru
          _
      $region48: #{tpu_custom_call.1} parent=5 // pred_fallthru
        _
    $region6: #{tpu_custom_call.1} parent=1 // loop_footer
      %s18 = sadd.s32 1, %s14
    $region7: #{tpu_custom_call.1} parent=1 // loop_footer_branch
      %13 = sbr.rel target = $region3
    $region8: #{tpu_custom_call.1} parent=1 // loop_exit
      _
    %1519 = vsyncpa [#allocation3], 1
    %s1520 = scalar_lea.sflag [#allocation3], 1
    %1521 = vsyncpa %s1520, 1

</llo_original>
